<compile_context>
chip_gen: v7x
topology: tpu7x:2x2x1
jax: 0.10.0
libtpu: 0.0.40
codegen_flags: <defaults>
</compile_context>

<pallas_src>
import functools

import jax
import jax.numpy as jnp
from jax import lax
from jax.experimental import pallas as pl
from jax.experimental.pallas import tpu as pltpu


_SUBLANE = 8
_MIN_TM = 64          # min tile height: amortizes the (8, C) accumulator RMW


def _round_up(x, m):
    return (x + m - 1) // m * m


# ------------------------- hardware queries (trace time) ---------------------

def _vmem_capacity_bytes():
    try:
        return int(pltpu.get_tpu_info().vmem_capacity_bytes)
    except Exception:
        return 128 << 20          # v5e/v6e capacity; safe fallback


def _num_tensorcores():
    """TensorCores per JAX device (2 on megacore v4/v5p and on v7x)."""
    try:
        dev = jax.devices()[0]
        if dev.platform != "tpu":
            return 1
        kind = str(getattr(dev, "device_kind", "")).lower()
        if any(tag in kind for tag in ("v4", "v5p", "7x")):
            return 2
    except Exception:
        pass
    return 1


# ----------------------------- per-criterion pointwise maps ------------------
# Each returns the (tm, C) float32 pointwise contribution; `mask` is either
# None (whole block in bounds, statically known) or a (tm, 1) bool row mask.
# Masked rows always contribute exactly 0.

def _l1_point(f, r, mask):
    d = jnp.abs(f - r.astype(jnp.float32))
    return d if mask is None else jnp.where(mask, d, 0.0)


def _l2_point(f, r, mask):
    d = f - r.astype(jnp.float32)
    d = d * d
    return d if mask is None else jnp.where(mask, d, 0.0)


def _kl_point(f, r, mask):
    # PyTorch KLDivLoss pointwise: target * (log target - input), 0 where
    # target == 0, with input = log(fake).
    r = r.astype(jnp.float32)
    if mask is not None:
        r = jnp.where(mask, r, 0.0)
        f = jnp.where(mask, f, 1.0)
    pos = r > 0
    safe_r = jnp.where(pos, r, 1.0)
    safe_f = jnp.where(pos, f, 1.0)
    return jnp.where(pos, r * (jnp.log(safe_r) - jnp.log(safe_f)), 0.0)


def _soft_ce_point(f, r, mask):
    # SoftCrossEntropy pointwise: -target * log(fake)
    r = r.astype(jnp.float32)
    if mask is not None:
        r = jnp.where(mask, r, 0.0)
        f = jnp.where(mask, f, 1.0)
    return -r * jnp.log(f)


def _ce_point(f, t, mask):
    # t: (tm, 1) int32 class indices; masked rows get t = -1 so nothing
    # matches, and f = 0 so lse stays bounded (no finfo.min overflow trick).
    tm, c = f.shape
    if mask is not None:
        f = jnp.where(mask, f, 0.0)
        t = jnp.where(mask, t, -1)
    m = jnp.max(f, axis=1, keepdims=True)
    lse = m + jnp.log(jnp.sum(jnp.exp(f - m), axis=1, keepdims=True))
    cls = lax.broadcasted_iota(jnp.int32, (tm, c), 1)
    return jnp.where(cls == t, lse - f, 0.0)


_POINT_FNS = {"l1": _l1_point, "l2": _l2_point,
              "KL": _kl_point, "soft_CE": _soft_ce_point}


# ----------------------------- reduction kernel ------------------------------

def _reduction_kernel(point_fn, inner, tm, n_rows, needs_mask,
                      f_ref, r_ref, o_ref):
    """Grid = (cores, row_blocks); the revisited (8, C) output block is the
    per-core float32 accumulator."""
    p = pl.program_id(0)
    i = pl.program_id(1)

    @pl.when(i == 0)
    def _():
        o_ref[...] = jnp.zeros_like(o_ref)

    f = f_ref[...].astype(jnp.float32)
    r = r_ref[...]

    if needs_mask:
        # Rows of this (logical) block that are in bounds; <= 0 for fully
        # padded blocks (which re-read the last valid block via the clamped
        # index_map and are masked out entirely here).
        valid = n_rows - (p * inner + i) * tm
        mask = lax.broadcasted_iota(jnp.int32, (tm, 1), 0) < valid
    else:
        mask = None

    pw = point_fn(f, r, mask)                        # (tm, C) float32
    c = pw.shape[1]
    if tm == _SUBLANE:
        fold = pw
    else:
        # Fold 8-row groups into a lane-shaped (8, C) partial: pure VPU adds,
        # no per-step cross-lane (XLU) reduce, no scalar SMEM round trip.
        fold = pw.reshape(tm // _SUBLANE, _SUBLANE, c).sum(axis=0)
    o_ref[...] += fold


# ----------------------------- tiling / launch --------------------------------

def _choose_tiling(n, c, c_r, f_item, r_item, row_block=None):
    vmem_cap = _vmem_capacity_bytes()
    num_cores = _num_tensorcores()

    # Per-input per-pipeline-buffer tile budget (generation aware):
    # ~4 MiB on 64 MiB-VMEM chips (v7x), ~6 MiB on 128 MiB-VMEM chips.
    tile_budget = (4 << 20) if vmem_cap <= (80 << 20) else (6 << 20)

    # Per-row VMEM footprint: double-buffered wire tiles for both inputs plus
    # the in-kernel float32 intermediates (astype copy, pointwise result, ...).
    per_row = 2 * c * f_item + 2 * c_r * r_item + 4 * c * 4
    fixed = (4 << 20) + 4 * _SUBLANE * c * 4         # slack + output buffers

    if row_block is not None:
        tm = max(_SUBLANE, _round_up(int(row_block), _SUBLANE))
    else:
        tm = max(_SUBLANE,
                 (tile_budget // max(1, c * f_item)) // _SUBLANE * _SUBLANE)
        tm = max(tm, _MIN_TM)
    # Hard cap so tiles + intermediates stay well under physical VMEM.
    tm_cap = int((0.70 * vmem_cap - fixed) / per_row)
    tm_cap = max(_SUBLANE, tm_cap // _SUBLANE * _SUBLANE)
    tm = min(tm, tm_cap)
    tm = max(_SUBLANE, min(tm, _round_up(n, _SUBLANE)))

    nb = -(-n // tm)                                  # logical row blocks
    if nb < num_cores:
        num_cores = 1
    nb_padded = _round_up(nb, num_cores)
    inner = nb_padded // num_cores
    needs_mask = (nb_padded * tm != n)

    need = per_row * tm + fixed
    vmem_limit = int(min(vmem_cap - (2 << 20), max(32 << 20, need)))
    return tm, inner, num_cores, nb, needs_mask, vmem_limit


def _run_reduction(point_fn, fake, r_arr, tm, inner, num_cores, nb, needs_mask,
                   vmem_limit, cost):
    n, c = fake.shape
    c_r = r_arr.shape[1]
    clamp = (num_cores * inner) > nb   # fully out-of-bounds padding blocks exist

    def in_map(p, i):
        b = p * inner + i
        if clamp:
            b = jnp.minimum(b, nb - 1)   # keep the DMA in bounds; kernel masks
        return (b, 0)

    out = pl.pallas_call(
        functools.partial(_reduction_kernel, point_fn, inner, tm, n, needs_mask),
        out_shape=jax.ShapeDtypeStruct((num_cores * _SUBLANE, c), jnp.float32),
        grid_spec=pltpu.PrefetchScalarGridSpec(
            num_scalar_prefetch=0,
            grid=(num_cores, inner),
            in_specs=[
                pl.BlockSpec((tm, c), in_map),
                pl.BlockSpec((tm, c_r), in_map),
            ],
            out_specs=pl.BlockSpec((_SUBLANE, c), lambda p, i: (p, 0)),
        ),
        compiler_params=pltpu.CompilerParams(
            dimension_semantics=("parallel", "arbitrary"),
            vmem_limit_bytes=vmem_limit,
        ),
        cost_estimate=cost,
    )(fake, r_arr)
    # Tiny (num_cores*8, C) final reduction + divide stays in plain JAX.
    return jnp.sum(out)


# ----------------------------- module-equivalent wrapper ---------------------

def lip_read_loss(fake, real, criterion="l1", row_block=None):
    """Equivalent of LipReadLoss(criterion)(fake, real) for 2-D (N, C) inputs.

    For criterion == 'CE', `real` is an int vector of class indices (N,).
    Inputs keep their wire dtype (bf16 stays bf16); accumulation is float32.
    """
    fake = jnp.asarray(fake)
    assert fake.ndim == 2, "lip_read_loss expects (N, C) inputs"
    n, c = fake.shape
    f_item = jnp.dtype(fake.dtype).itemsize

    if criterion in _POINT_FNS:
        r_arr = jnp.asarray(real)
        assert r_arr.shape == (n, c)
        c_r, r_item = c, jnp.dtype(r_arr.dtype).itemsize
        point_fn = _POINT_FNS[criterion]
        denom = n * c if criterion in ("l1", "l2", "KL") else n
        transc = 2 * n * c if criterion == "KL" else (
            n * c if criterion == "soft_CE" else 0)
    elif criterion == "CE":
        # Stream int32 class indices as an (N, 1) side input; the one-hot
        # selection is built in-kernel with broadcasted_iota.
        # TODO(synk): PyTorch CrossEntropyLoss raises on out-of-range / negative
        # targets; here such targets silently contribute 0.
        r_arr = jnp.asarray(real, jnp.int32).reshape(n, 1)
        c_r, r_item = 1, 4
        point_fn = _ce_point
        denom = n
        transc = n * c + n
    else:
        raise ValueError(f"unknown criterion {criterion!r}")

    tm, inner, num_cores, nb, needs_mask, vmem_limit = _choose_tiling(
        n, c, c_r, f_item, r_item, row_block)

    cost = pl.CostEstimate(
        flops=6 * n * c,
        transcendentals=int(transc),
        bytes_accessed=n * c * f_item + n * c_r * r_item
        + num_cores * _SUBLANE * c * 4,
    )

    total = _run_reduction(point_fn, fake, r_arr, tm, inner, num_cores, nb,
                           needs_mask, vmem_limit, cost)
    return total / jnp.float32(denom)


# ----------------------------- reference (plain JAX) -------------------------

def _reference(fake, real, criterion):
    fake = jnp.asarray(fake, jnp.float32)
    if criterion == "l1":
        return jnp.mean(jnp.abs(fake - real))
    if criterion == "l2":
        return jnp.mean((fake - real) ** 2)
    if criterion == "KL":
        safe_r = jnp.where(real > 0, real, 1.0)
        pw = jnp.where(real > 0, real * (jnp.log(safe_r) - jnp.log(fake)), 0.0)
        return jnp.mean(pw)
    if criterion == "CE":
        ls = jax.nn.log_softmax(fake, axis=1)
        idx = jnp.asarray(real, jnp.int32)[:, None]
        return jnp.mean(-jnp.take_along_axis(ls, idx, axis=1))
    if criterion == "soft_CE":
        return jnp.mean(jnp.sum(-real * jnp.log(fake), axis=1))
    raise ValueError(criterion)


# ----------------------------- demo ------------------------------------------

if __name__ == "__main__":
    key = jax.random.PRNGKey(0)

    # (N, C, row_block):
    #   (10, 96, None) : unaligned shape -> full-extent C block (<128 lanes) and
    #                    an in-kernel ragged row mask, no wrapper pad copy,
    #   (48, 128, 8)   : multi-block pipelined path, exact row tiling (no mask),
    #   (50, 256, 16)  : multi-block path with a ragged, masked last block.
    shape_cases = [(10, 96, None), (48, 128, 8), (50, 256, 16)]

    for (N, C, rb) in shape_cases:
        k1, k2, k3, k4 = jax.random.split(jax.random.fold_in(key, N), 4)

        # Regression-style inputs for l1 / l2.
        fake_reg = jax.random.normal(k1, (N, C), jnp.float32)
        real_reg = jax.random.normal(k2, (N, C), jnp.float32)

        # Probability-style inputs for KL / soft_CE (strictly positive).
        fake_prob = jax.nn.softmax(jax.random.normal(k3, (N, C), jnp.float32), axis=1)
        real_prob = jax.nn.softmax(jax.random.normal(k4, (N, C), jnp.float32), axis=1)

        # Logits + integer class indices for CE.
        fake_logits = fake_reg
        real_idx = jnp.argmax(real_prob, axis=1).astype(jnp.int32)

        cases = [
            ("l1", fake_reg, real_reg),
            ("l2", fake_reg, real_reg),
            ("KL", fake_prob, real_prob),
            ("CE", fake_logits, real_idx),
            ("soft_CE", fake_prob, real_prob),
        ]

        for crit, f, r in cases:
            out = jax.block_until_ready(
                lip_read_loss(f, r, criterion=crit, row_block=rb))
            ref = jax.block_until_ready(_reference(f, r, crit))
            assert jnp.allclose(out, ref, rtol=1e-5, atol=1e-6), (N, C, crit, out, ref)

    print("KERNEL_OK")
</pallas_src>

<mosaic_0001>
module attributes {stable_mosaic.version = 11 : i64} {
  func.func @_reduction_kernel(%arg0: i32, %arg1: i32, %arg2: memref<16x96xf32, #tpu.memory_space<vmem>>, %arg3: memref<16x96xf32, #tpu.memory_space<vmem>>, %arg4: memref<8x96xf32, #tpu.memory_space<vmem>>) attributes {dimension_semantics = [#tpu.dimension_semantics<parallel>, #tpu.dimension_semantics<arbitrary>], iteration_bounds = array<i64: 1, 1>, scalar_prefetch = 0 : i64, scratch_operands = 0 : i64, tpu.core_type = #tpu.core_type<tc>, window_params = [{transform_indices = @transform_0, window_bounds = array<i64: 16, 96>}, {transform_indices = @transform_1, window_bounds = array<i64: 16, 96>}, {transform_indices = @transform_2, window_bounds = array<i64: 8, 96>}]} {
    %c0_i32 = arith.constant 0 : i32
    %0 = arith.cmpi eq, %arg1, %c0_i32 : i32
    %1 = arith.extui %0 : i1 to i32
    %c0_i32_0 = arith.constant 0 : i32
    %2 = arith.cmpi ne, %1, %c0_i32_0 : i32
    scf.if %2 {
      %cst_9 = arith.constant 0.000000e+00 : f32
      %23 = vector.broadcast %cst_9 : f32 to vector<8x96xf32>
      %c0_10 = arith.constant 0 : index
      %c0_11 = arith.constant 0 : index
      %24 = vector.load %arg4[%c0_10, %c0_11] : memref<8x96xf32, #tpu.memory_space<vmem>>, vector<8x96xf32>
      tpu.vector_store %arg4[%c0_10, %c0_11], %23 {strides = array<i32>} : memref<8x96xf32, #tpu.memory_space<vmem>>, vector<8x96xf32>,
    } else {
    }
    %c0 = arith.constant 0 : index
    %c0_1 = arith.constant 0 : index
    %3 = vector.load %arg2[%c0, %c0_1] : memref<16x96xf32, #tpu.memory_space<vmem>>, vector<16x96xf32>
    %c0_2 = arith.constant 0 : index
    %c0_3 = arith.constant 0 : index
    %4 = vector.load %arg3[%c0_2, %c0_3] : memref<16x96xf32, #tpu.memory_space<vmem>>, vector<16x96xf32>
    %c1_i32 = arith.constant 1 : i32
    %5 = arith.muli %arg0, %c1_i32 : i32
    %6 = arith.addi %5, %arg1 : i32
    %c16_i32 = arith.constant 16 : i32
    %7 = arith.muli %6, %c16_i32 : i32
    %c10_i32 = arith.constant 10 : i32
    %8 = arith.subi %c10_i32, %7 : i32
    %9 = tpu.iota {dimensions = array<i32: 0>} : vector<16x1xi32>
    %10 = vector.broadcast %8 : i32 to vector<16x1xi32>
    %11 = arith.cmpi slt, %9, %10 : vector<16x1xi32>
    %12 = arith.subf %3, %4 : vector<16x96xf32>
    %13 = math.absf %12 : vector<16x96xf32>
    %cst = arith.constant 0.000000e+00 : f32
    %14 = vector.shape_cast %11 : vector<16x1xi1> to vector<16x1xi1>
    %15 = vector.broadcast %14 : vector<16x1xi1> to vector<16x96xi1>
    %16 = vector.broadcast %cst : f32 to vector<16x96xf32>
    %17 = arith.select %15, %13, %16 : vector<16x96xi1>, vector<16x96xf32>
    %18 = vector.shape_cast %17 : vector<16x96xf32> to vector<2x8x96xf32>
    %cst_4 = arith.constant dense<0.000000e+00> : vector<8x96xf32>
    %19 = vector.multi_reduction <add>, %18, %cst_4 [0] : vector<2x8x96xf32> to vector<8x96xf32>
    %c0_5 = arith.constant 0 : index
    %c0_6 = arith.constant 0 : index
    %20 = vector.load %arg4[%c0_5, %c0_6] : memref<8x96xf32, #tpu.memory_space<vmem>>, vector<8x96xf32>
    %21 = arith.addf %20, %19 : vector<8x96xf32>
    %c0_7 = arith.constant 0 : index
    %c0_8 = arith.constant 0 : index
    %22 = vector.load %arg4[%c0_7, %c0_8] : memref<8x96xf32, #tpu.memory_space<vmem>>, vector<8x96xf32>
    tpu.vector_store %arg4[%c0_7, %c0_8], %21 {strides = array<i32>} : memref<8x96xf32, #tpu.memory_space<vmem>>, vector<8x96xf32>,
    return
  }
  func.func @transform_0(%arg0: i32, %arg1: i32) -> (i32, i32) {
    %c1_i32 = arith.constant 1 : i32
    %0 = arith.muli %arg0, %c1_i32 : i32
    %1 = arith.addi %0, %arg1 : i32
    %c0_i32 = arith.constant 0 : i32
    %c0_i32_0 = arith.constant 0 : i32
    return %1, %c0_i32 : i32, i32
  }
  func.func @transform_1(%arg0: i32, %arg1: i32) -> (i32, i32) {
    %c1_i32 = arith.constant 1 : i32
    %0 = arith.muli %arg0, %c1_i32 : i32
    %1 = arith.addi %0, %arg1 : i32
    %c0_i32 = arith.constant 0 : i32
    %c0_i32_0 = arith.constant 0 : i32
    return %1, %c0_i32 : i32, i32
  }
  func.func @transform_2(%arg0: i32, %arg1: i32) -> (i32, i32) {
    %c0_i32 = arith.constant 0 : i32
    %c0_i32_0 = arith.constant 0 : i32
    return %arg0, %c0_i32 : i32, i32
  }
}

</mosaic_0001>

<llo_original>
// kernel: tpu_custom_call.1
$region0: #{tpu_custom_call.1}
  #allocation0 [shape = 'u32[]', space=smem, size = 0x4, offset = 0x4, fixed_abs, tag = 'smem constant byte address 0x4 - core index']
  #allocation1 [shape = 'u32[144,128]{1,0:T(1,128)}', space=vmem, size = 0x12000, scoped, tag = 'internal scratch']
  %s0 = inlined_call_operand.hbm [shape: f32[10,96], index: 0, kind: input, shape index: {}]
  %s1 = inlined_call_operand.hbm [shape: f32[10,96], index: 1, kind: input, shape index: {}]
  %s2 = inlined_call_operand.hbm [shape: f32[8,96], index: 2, kind: output, shape index: {}]
  %s3 = sld [smem:[#allocation0]]
  $region30: #{tpu_custom_call.1} parent=0
    _
  %s5 = ssub.s32 1, %s3
  %s6 = scalar_select 0, %s5, %s3
  $region1: #{tpu_custom_call.1} parent=0
    #allocation2 [shape = 'u8[8192]{0}', space=vmem, size = 0x2000, scoped, tag = 'input window, operand 0, single buffered']
    #allocation3 [shape = 's32[1]{0}', space=sflag, size = 0x4, scoped, tag = 'scoped memory for tpu_custom_call.1']
    #allocation4 [shape = 's32[1]{0}', space=sflag, size = 0x4, scoped, tag = 'scoped memory for tpu_custom_call.1']
    #allocation5 [shape = 'u8[8192]{0}', space=vmem, size = 0x2000, scoped, tag = 'input window, operand 1, single buffered']
    #allocation6 [shape = 's32[1]{0}', space=sflag, size = 0x4, scoped, tag = 'scoped memory for tpu_custom_call.1']
    #allocation7 [shape = 'u8[4096]{0}', space=vmem, size = 0x1000, scoped, tag = 'output window, operand 0, single buffered']
    %7 = vsyncpa [#allocation3], 0
    %8 = vsyncpa [#allocation6], 0
    %9 = vsyncpa [#allocation4], 0
    // Predicated region
    $region2: #{tpu_custom_call.1} parent=1 // pred_check
      _
    $region3: #{tpu_custom_call.1} parent=1 // pred_check_branch
      %11 = sbr.rel (0) target = $region5
    $region4: #{tpu_custom_call.1} parent=1 // pred_region
      %s12 = sadd.s32 0, 0
      %s13 = smul.u32 2, %s12
      %s15 = ssub.s32 256, 256
      %16 = vsyncadd [#allocation3], %s15
      %s17 = smul.addr %s13, 128
      %s18 = scalar_lea.hbm %s0, %s17
      %s19 = sshll.u32 [#allocation2], 4
      %s20 = int_to_ptr.vmem [resolvable:$true] %s19
      %25 = dma.hbm_to_vmem [thread:$0]  %s18, 256, %s20, [#allocation3], 128, 128, 8
    $region5: #{tpu_custom_call.1} parent=1 // pred_fallthru
      _
    // Predicated region
    $region6: #{tpu_custom_call.1} parent=1 // pred_check
      _
    $region7: #{tpu_custom_call.1} parent=1 // pred_check_branch
      %27 = sbr.rel (0) target = $region9
    $region8: #{tpu_custom_call.1} parent=1 // pred_region
      %s28 = sadd.s32 0, 0
      %s29 = smul.u32 2, %s28
      %s31 = ssub.s32 256, 256
      %32 = vsyncadd [#allocation6], %s31
      %s33 = smul.addr %s29, 128
      %s34 = scalar_lea.hbm %s1, %s33
      %s35 = sshll.u32 [#allocation5], 4
      %s36 = int_to_ptr.vmem [resolvable:$true] %s35
      %41 = dma.hbm_to_vmem [thread:$0]  %s34, 256, %s36, [#allocation6], 128, 128, 8
    $region9: #{tpu_custom_call.1} parent=1 // pred_fallthru
      _
    // Predicated region
    $region10: #{tpu_custom_call.1} parent=1 // pred_check
      _
    $region11: #{tpu_custom_call.1} parent=1 // pred_check_branch
      %43 = sbr.rel (0) target = $region13
    $region12: #{tpu_custom_call.1} parent=1 // pred_region
      %44 = dma.done [#allocation3], 256
    $region13: #{tpu_custom_call.1} parent=1 // pred_fallthru
      _
    // Predicated region
    $region14: #{tpu_custom_call.1} parent=1 // pred_check
      _
    $region15: #{tpu_custom_call.1} parent=1 // pred_check_branch
      %46 = sbr.rel (0) target = $region17
    $region16: #{tpu_custom_call.1} parent=1 // pred_region
      %47 = dma.done [#allocation6], 256
    $region17: #{tpu_custom_call.1} parent=1 // pred_fallthru
      _
    %s48 = sadd.s32 0, 0
    %s49 = smul.u32 2, %s48
    %s50 = sadd.s32 0, 0
    %s51 = smul.u32 2, %s50
    %p52 = scmp.eq.s32.totalorder 0, 0
    // Predicated region
    $region18: #{tpu_custom_call.1} parent=1 // pred_check
      %p53 = pneg %p52
    $region19: #{tpu_custom_call.1} parent=1 // pred_check_branch
      %55 = sbr.rel (%p53) target = $region21
    $region20: #{tpu_custom_call.1} parent=1 // pred_region
      %vm56 = vcmask 785408
      %57 = vst.msk [vmem:[#allocation7] sm:$0xff] %vm56, 0.0
    $region21: #{tpu_custom_call.1} parent=1 // pred_fallthru
      _
    %v58 = vld [vmem:[#allocation2] sm:$0xff]
    %v59 = vld [vmem:[#allocation2 + $0x8] sm:$0xff]
    %v60 = vld [vmem:[#allocation5] sm:$0xff]
    %v61 = vld [vmem:[#allocation5 + $0x8] sm:$0xff]
    %s62 = sadd.s32 0, 0
    %s63 = smul.u32 %s62, 16
    %s64 = ssub.s32 10, %s63
    %v65 = vlaneseq
    %v66 = vshrl.u32 %v65, 7
    %v67 = vadd.s32 %v66, 8
    %v68 = vstv %s64
    %vm69 = vcmp.lt.s32.totalorder %v66, %v68
    %vm70 = vcmp.lt.s32.totalorder %v67, %v68
    %v71 = vsub.f32 %v58, %v60
    %v72 = vsub.f32 %v59, %v61
    %v73 = vand.u32 2147483647, %v71
    %v74 = vand.u32 2147483647, %v72
    %v75 = vsel %vm69, 1, 0
    %v76 = vsel %vm70, 1, 0
    %vm77 = vcmp.eq.s32.totalorder %v75, 1
    %vm78 = vcmp.eq.s32.totalorder %v76, 1
    %v79 = vsel %vm77, %v73, 0.0
    %v80 = vsel %vm78, %v74, 0.0
    %vm81 = vcmask 785408
    %v82 = vsel %vm81, %v79, 0.0
    %v83 = vsel %vm81, %v80, 0.0
    %v84 = vadd.f32 %v82, %v83
    %v85 = vld [vmem:[#allocation7] sm:$0xff]
    %v86 = vadd.f32 %v85, %v84
    %87 = vst.msk [vmem:[#allocation7] sm:$0xff] %vm81, %v86
    // Predicated region
    $region22: #{tpu_custom_call.1} parent=1 // pred_check
      _
    $region23: #{tpu_custom_call.1} parent=1 // pred_check_branch
      %89 = sbr.rel (0) target = $region25
    $region24: #{tpu_custom_call.1} parent=1 // pred_region
      %s91 = ssub.s32 128, 128
      %92 = vsyncadd [#allocation4], %s91
      %s94 = sshll.u32 [#allocation7], 4
      %s95 = int_to_ptr.vmem [resolvable:$true] %s94
      %97 = dma.vmem_to_hbm [thread:$0]  %s95, 128, %s2, [#allocation4]
    $region25: #{tpu_custom_call.1} parent=1 // pred_fallthru
      _
    // Predicated region
    $region26: #{tpu_custom_call.1} parent=1 // pred_check
      _
    $region27: #{tpu_custom_call.1} parent=1 // pred_check_branch
      %99 = sbr.rel (0) target = $region29
    $region28: #{tpu_custom_call.1} parent=1 // pred_region
      %100 = dma.done [#allocation4], 128
    $region29: #{tpu_custom_call.1} parent=1 // pred_fallthru
      _
    %101 = vsyncpa [#allocation3], 1
    %102 = vsyncpa [#allocation6], 1
    %103 = vsyncpa [#allocation4], 1

</llo_original>
